<compile_context>
chip_gen: v5e
topology: v5e:2x2
jax: 0.10.0
libtpu: 0.0.40
codegen_flags: <defaults>
</compile_context>

<pallas_src>
import numpy as np
import jax
import jax.numpy as jnp
from jax import lax
from jax.experimental import pallas as pl
from jax.experimental.pallas import tpu as pltpu

# ---- static module configuration (mirrors EMB.__init__) --------------------
FIELD_DIMS = (3, 4, 5, 6)          # field_dims
NUM_FIELDS = len(FIELD_DIMS)       # F = 4
EMBED_DIM = 16                     # D
VOCAB = int(sum(FIELD_DIMS))       # V = 18
# offsets = (0, *cumsum(field_dims)[:-1]) -- static Python ints
OFFSETS = tuple(int(v) for v in np.concatenate(([0], np.cumsum(FIELD_DIMS)[:-1])))

# Pack P batch rows per physical output row:
#   * output lane width P*D*F = 256  -> multiple of 128, unmasked lane-dense stores
#   * multi-hot lane width  P*V  = 72 -> fits one vreg lane span
PACK = 4
PF = PACK * NUM_FIELDS                 # 16  (index columns per packed row)
PV = PACK * VOCAB                      # 72  (multi-hot / matmul K dim)
PDF = PACK * EMBED_DIM * NUM_FIELDS    # 256 (output lanes per packed row)

# static per-column flat offset for the packed (rows, P*F) index layout:
# column j = p*F + f holds field f of packed position p -> offset OFFSETS[f] + p*V
_OFFS_P_NP = np.array(
    [OFFSETS[f] + p * VOCAB for p in range(PACK) for f in range(NUM_FIELDS)],
    dtype=np.int32,
)

# which field owns each vocab slot
_FIELD_OF = np.zeros(VOCAB, dtype=np.int64)
for _f, (_o, _n) in enumerate(zip(OFFSETS, FIELD_DIMS)):
    _FIELD_OF[_o:_o + _n] = _f

# static selection matrix S (P*F, P*V): S[j, c] = 1 iff index column j "owns"
# vocab slot c (p = c // V, f = field_of(c % V), j = p*F + f).  One tiny MXU
# matmul idx @ S expands the P*F flat indices to per-lane expected values.
_SEL_NP = np.zeros((PF, PV), dtype=np.float32)
for _c in range(PV):
    _p, _v = divmod(_c, VOCAB)
    _SEL_NP[_p * NUM_FIELDS + int(_FIELD_OF[_v]), _c] = 1.0


def emb_kernel(idx_ref, sel_ref, w_ref, out_ref):
    """One batch block; all gather work lives on the MXU, one VPU compare.

    idx_ref : VMEM (tbh, P*F)   int32  -- flat (offset-added) indices, P rows packed
    sel_ref : VMEM (P*F, P*V)   f32    -- static 0/1 lane-expansion matrix
    w_ref   : VMEM (P*V, P*D*F) f32    -- block-diag gather+transpose weight
    out_ref : VMEM (tbh, P*D*F) f32    -- lane-dense 256-lane output block
    """
    tbh = out_ref.shape[0]
    idx_f = idx_ref[...].astype(jnp.float32)          # exact: indices << 2^24
    # Expand indices to per-lane targets: E[b, c] = flat_idx[b, owner(c)]   (MXU)
    expanded = jnp.dot(idx_f, sel_ref[...], preferred_element_type=jnp.float32)
    # One-hot gather mask in a single compare + convert                     (VPU)
    lane = lax.broadcasted_iota(jnp.int32, (tbh, PV), 1).astype(jnp.float32)
    m = (expanded == lane).astype(jnp.float32)
    # Gather + transpose + P-row lane packing in one MXU matmul
    out_ref[...] = jnp.dot(
        m, w_ref[...], preferred_element_type=jnp.float32
    ).astype(out_ref.dtype)


def make_emb_weights(table):
    """Precompute (sel, w2) ONCE per table (hoisted off the forward path).

    w2 (P*V, P*D*F): w2[p*V+v, p*D*F + d*F + f] = table[v, d] * [field_of(v)==f]
    -> folds the gather, the (F,D)->(D,F) transpose and the P-row lane packing
    into a single matmul weight.  O(V*D*F*P^2) ~ 72 KiB; independent of batch.
    """
    V, D = table.shape
    assert V == VOCAB and D == EMBED_DIM
    field_onehot = jnp.asarray(np.eye(NUM_FIELDS, dtype=np.float32)[_FIELD_OF])  # (V,F)
    w = (table[:, :, None] * field_onehot[:, None, :]).reshape(V, D * NUM_FIELDS)
    blocks = []
    for p in range(PACK):
        row = [jnp.zeros_like(w)] * PACK
        row[p] = w
        blocks.append(jnp.concatenate(row, axis=1))
    w2 = jnp.concatenate(blocks, axis=0)                                   # (PV, PDF)
    sel = jnp.asarray(_SEL_NP)                                             # (PF, PV)
    return sel, w2


def emb_forward(x, sel, w2, *, block_rows=8192):
    """x: (B, F) int field indices.  Returns (B, D, F) f32 == EMB.forward(x)."""
    B, F = x.shape
    assert F == NUM_FIELDS
    D = EMBED_DIM

    # ---- tile sizing --------------------------------------------------------
    # VMEM per packed row (P=4), double-buffered where pipelined:
    #   idx   (16 cols lane-padded to 128, i32) : 2 * 512 B
    #   out   (256 lanes f32)                   : 2 * 1024 B
    #   temporaries (idx_f, expanded, iota, m)  : ~2 KiB
    # ~5 KiB / packed row -> cap tbh at 2048 (~10 MiB): safe under v5e's 16 MiB
    # default scoped VMEM, v7x's 64 MiB and v6e's 128 MiB, while big enough to
    # amortize the ~0.35 us per-grid-step pipeline overhead (8192 batch rows/step).
    TBH_CAP = 2048
    rows = pl.cdiv(B, PACK)                          # packed rows needed
    tbh = min(max(block_rows // PACK, 8), TBH_CAP)
    if rows <= tbh:
        if rows >= 16:
            # keep nb >= 2 so the "parallel" axis shards across v7x's two TCs
            tbh = ((pl.cdiv(rows, 2) + 7) // 8) * 8
        else:
            tbh = rows                               # single full-extent block
    else:
        tbh = (tbh // 8) * 8                         # sublane-aligned
    nb = pl.cdiv(rows, tbh)
    rows_p = nb * tbh
    bp = rows_p * PACK

    # ---- host-side packing (offset add fuses into the pad/reshape in XLA) ---
    xi = x.astype(jnp.int32)
    if bp != B:
        xi = jnp.pad(xi, ((0, bp - B), (0, 0)))      # pad rows use index 0 (valid)
    xp = xi.reshape(rows_p, PF) + jnp.asarray(_OFFS_P_NP)[None, :]

    out_packed = pl.pallas_call(
        emb_kernel,
        out_shape=jax.ShapeDtypeStruct((rows_p, PDF), w2.dtype),
        grid=(nb,),
        in_specs=[
            pl.BlockSpec((tbh, PF), lambda i: (i, 0)),      # indices (VMEM)
            pl.BlockSpec((PF, PV), lambda i: (0, 0)),       # expansion matrix, resident
            pl.BlockSpec((PV, PDF), lambda i: (0, 0)),      # gather weight, resident
        ],
        out_specs=pl.BlockSpec((tbh, PDF), lambda i: (i, 0)),
        compiler_params=pltpu.CompilerParams(
            dimension_semantics=("parallel",),
        ),
    )(xp, sel, w2)

    # (rows_p, P*D*F) -> (bp, D, F) is a pure row-major reshape (no transpose pass).
    return out_packed.reshape(bp, D, NUM_FIELDS)[:B]


def _reference(x, table):
    flat = x.astype(jnp.int32) + jnp.asarray(OFFSETS, dtype=jnp.int32)[None, :]
    return jnp.transpose(jnp.take(table, flat, axis=0), (0, 2, 1))


if __name__ == "__main__":
    key = jax.random.PRNGKey(0)
    k_tab, k_x1, k_x2 = jax.random.split(key, 3)

    # deterministic xavier_uniform init for the embedding table
    bound = float(np.sqrt(6.0 / (VOCAB + EMBED_DIM)))
    table = jax.random.uniform(
        k_tab, (VOCAB, EMBED_DIM), dtype=jnp.float32, minval=-bound, maxval=bound
    )

    # build the packed weights / selection matrix ONCE (hoisted per perf review)
    sel, w2 = make_emb_weights(table)

    def make_x(k, batch):
        ks = jax.random.split(k, NUM_FIELDS)
        cols = [
            jax.random.randint(ks[f], (batch,), 0, FIELD_DIMS[f], dtype=jnp.int32)
            for f in range(NUM_FIELDS)
        ]
        return jnp.stack(cols, axis=1)               # (batch, NUM_FIELDS) int32

    # small demo shape
    BATCH = 8
    x = make_x(k_x1, BATCH)
    out = jax.block_until_ready(emb_forward(x, sel, w2))
    assert out.shape == (BATCH, EMBED_DIM, NUM_FIELDS), out.shape
    np.testing.assert_allclose(
        np.asarray(out), np.asarray(_reference(x, table)), rtol=1e-5, atol=1e-5
    )

    # exercise the multi-block grid + odd-batch (non-multiple-of-PACK) padding path
    B2 = 150
    x2 = make_x(k_x2, B2)
    out2 = jax.block_until_ready(emb_forward(x2, sel, w2, block_rows=64))
    np.testing.assert_allclose(
        np.asarray(out2), np.asarray(_reference(x2, table)), rtol=1e-5, atol=1e-5
    )

    print("KERNEL_OK")
</pallas_src>

<mosaic_0001>
module attributes {stable_mosaic.version = 11 : i64} {
  func.func @emb_kernel(%arg0: i32, %arg1: memref<2x16xi32, #tpu.memory_space<vmem>>, %arg2: memref<16x72xf32, #tpu.memory_space<vmem>>, %arg3: memref<72x256xf32, #tpu.memory_space<vmem>>, %arg4: memref<2x256xf32, #tpu.memory_space<vmem>>) attributes {dimension_semantics = [#tpu.dimension_semantics<parallel>], iteration_bounds = array<i64: 1>, scalar_prefetch = 0 : i64, scratch_operands = 0 : i64, tpu.core_type = #tpu.core_type<tc>, window_params = [{transform_indices = @transform_0, window_bounds = array<i64: 2, 16>}, {pipeline_mode = #tpu.pipeline_mode<synchronous>, transform_indices = @transform_1, window_bounds = array<i64: 16, 72>}, {pipeline_mode = #tpu.pipeline_mode<synchronous>, transform_indices = @transform_2, window_bounds = array<i64: 72, 256>}, {transform_indices = @transform_3, window_bounds = array<i64: 2, 256>}]} {
    %c0 = arith.constant 0 : index
    %c0_0 = arith.constant 0 : index
    %0 = vector.load %arg1[%c0, %c0_0] : memref<2x16xi32, #tpu.memory_space<vmem>>, vector<2x16xi32>
    %1 = arith.sitofp %0 : vector<2x16xi32> to vector<2x16xf32>
    %c0_1 = arith.constant 0 : index
    %c0_2 = arith.constant 0 : index
    %2 = vector.load %arg2[%c0_1, %c0_2] : memref<16x72xf32, #tpu.memory_space<vmem>>, vector<16x72xf32>
    %cst = arith.constant dense<0.000000e+00> : vector<2x72xf32>
    %3 = tpu.matmul %1, %2, %cst {dimension_numbers = #tpu.dot_dimension_numbers<[1], [0], [0], [1], [0, 0, 1, 1], [], []>} : vector<2x16xf32>, vector<16x72xf32>, vector<2x72xf32> -> vector<2x72xf32>
    %4 = tpu.iota {dimensions = array<i32: 1>} : vector<2x72xi32>
    %5 = arith.sitofp %4 : vector<2x72xi32> to vector<2x72xf32>
    %6 = arith.cmpf oeq, %3, %5 : vector<2x72xf32>
    %7 = arith.extui %6 : vector<2x72xi1> to vector<2x72xi32>
    %8 = arith.sitofp %7 : vector<2x72xi32> to vector<2x72xf32>
    %c0_3 = arith.constant 0 : index
    %c0_4 = arith.constant 0 : index
    %9 = vector.load %arg3[%c0_3, %c0_4] : memref<72x256xf32, #tpu.memory_space<vmem>>, vector<72x256xf32>
    %cst_5 = arith.constant dense<0.000000e+00> : vector<2x256xf32>
    %10 = tpu.matmul %8, %9, %cst_5 {dimension_numbers = #tpu.dot_dimension_numbers<[1], [0], [0], [1], [0, 0, 1, 1], [], []>} : vector<2x72xf32>, vector<72x256xf32>, vector<2x256xf32> -> vector<2x256xf32>
    %c0_6 = arith.constant 0 : index
    %c0_7 = arith.constant 0 : index
    %11 = vector.load %arg4[%c0_6, %c0_7] : memref<2x256xf32, #tpu.memory_space<vmem>>, vector<2x256xf32>
    tpu.vector_store %arg4[%c0_6, %c0_7], %10 {strides = array<i32>} : memref<2x256xf32, #tpu.memory_space<vmem>>, vector<2x256xf32>,
    return
  }
  func.func @transform_0(%arg0: i32) -> (i32, i32) {
    %c0_i32 = arith.constant 0 : i32
    %c0_i32_0 = arith.constant 0 : i32
    return %arg0, %c0_i32 : i32, i32
  }
  func.func @transform_1(%arg0: i32) -> (i32, i32) {
    %c0_i32 = arith.constant 0 : i32
    %c0_i32_0 = arith.constant 0 : i32
    %c0_i32_1 = arith.constant 0 : i32
    return %c0_i32, %c0_i32_0 : i32, i32
  }
  func.func @transform_2(%arg0: i32) -> (i32, i32) {
    %c0_i32 = arith.constant 0 : i32
    %c0_i32_0 = arith.constant 0 : i32
    %c0_i32_1 = arith.constant 0 : i32
    return %c0_i32, %c0_i32_0 : i32, i32
  }
  func.func @transform_3(%arg0: i32) -> (i32, i32) {
    %c0_i32 = arith.constant 0 : i32
    %c0_i32_0 = arith.constant 0 : i32
    return %arg0, %c0_i32 : i32, i32
  }
}

</mosaic_0001>

<llo_original>
// kernel: tpu_custom_call.1
$region0: #{tpu_custom_call.1}
  #allocation0 [shape = 'u32[]', space=smem, size = 0x4, offset = 0x4, fixed_abs, tag = 'smem constant byte address 0x4 - core index']
  #allocation1 [shape = 'u32[72,128]{1,0:T(1,128)}', space=vmem, size = 0x9000, scoped, tag = 'internal scratch']
  %s0 = inlined_call_operand.hbm [shape: s32[2,16], index: 0, kind: input, shape index: {}]
  %s1 = inlined_call_operand.hbm [shape: f32[16,72], index: 1, kind: input, shape index: {}]
  %s2 = inlined_call_operand.hbm [shape: f32[72,256], index: 2, kind: input, shape index: {}]
  %s3 = inlined_call_operand.hbm [shape: f32[2,256], index: 3, kind: output, shape index: {}]
  %s4 = sld [smem:[#allocation0]]
  $region34: #{tpu_custom_call.1} parent=0
    _
  %s6 = ssub.s32 1, %s4
  %s7 = scalar_select 0, %s6, %s4
  $region1: #{tpu_custom_call.1} parent=0
    #allocation2 [shape = 'u8[1024]{0}', space=vmem, size = 0x400, scoped, tag = 'input window, operand 0, single buffered']
    #allocation3 [shape = 's32[1]{0}', space=sflag, size = 0x4, scoped, tag = 'scoped memory for tpu_custom_call.1']
    #allocation4 [shape = 's32[1]{0}', space=sflag, size = 0x4, scoped, tag = 'scoped memory for tpu_custom_call.1']
    #allocation5 [shape = 'u8[8192]{0}', space=vmem, size = 0x2000, scoped, tag = 'input window, operand 1, single buffered']
    #allocation6 [shape = 's32[1]{0}', space=sflag, size = 0x4, scoped, tag = 'scoped memory for tpu_custom_call.1']
    #allocation7 [shape = 'u8[73728]{0}', space=vmem, size = 0x12000, scoped, tag = 'input window, operand 2, single buffered']
    #allocation8 [shape = 'u8[2048]{0}', space=vmem, size = 0x800, scoped, tag = 'output window, operand 0, single buffered']
    %8 = vsyncpa [#allocation3], 0
    %9 = vsyncpa [#allocation6], 0
    %10 = vsyncpa [#allocation4], 0
    // Predicated region
    $region2: #{tpu_custom_call.1} parent=1 // pred_check
      _
    $region3: #{tpu_custom_call.1} parent=1 // pred_check_branch
      %12 = sbr.rel (0) target = $region5
    $region4: #{tpu_custom_call.1} parent=1 // pred_region
      %14 = vsyncadd [#allocation3], 0
      %s16 = sshll.u32 %s0, 4
      %s17 = int_to_ptr.hbm [resolvable:$true] %s16
      %s18 = sshll.u32 [#allocation2], 4
      %s19 = int_to_ptr.vmem [resolvable:$true] %s18
      %21 = dma.hbm_to_vmem [thread:$0]  %s17, 32, %s19, [#allocation3]
    $region5: #{tpu_custom_call.1} parent=1 // pred_fallthru
      _
    // Predicated region
    $region6: #{tpu_custom_call.1} parent=1 // pred_check
      _
    $region7: #{tpu_custom_call.1} parent=1 // pred_check_branch
      %23 = sbr.rel (0) target = $region9
    $region8: #{tpu_custom_call.1} parent=1 // pred_region
      %25 = vsyncadd [#allocation6], 0
      %s26 = sshll.u32 %s1, 4
      %s27 = int_to_ptr.hbm [resolvable:$true] %s26
      %s28 = sshll.u32 [#allocation5], 4
      %s29 = int_to_ptr.vmem [resolvable:$true] %s28
      %34 = dma.hbm_to_vmem [thread:$0]  %s27, 256, %s29, [#allocation6], 128, 128, 8
    $region9: #{tpu_custom_call.1} parent=1 // pred_fallthru
      _
    // Predicated region
    $region10: #{tpu_custom_call.1} parent=1 // pred_check
      _
    $region11: #{tpu_custom_call.1} parent=1 // pred_check_branch
      %36 = sbr.rel (0) target = $region13
    $region12: #{tpu_custom_call.1} parent=1 // pred_region
      %38 = vsyncadd [#allocation6], 0
      %s39 = sshll.u32 %s2, 4
      %s40 = int_to_ptr.hbm [resolvable:$true] %s39
      %s41 = sshll.u32 [#allocation7], 4
      %s42 = int_to_ptr.vmem [resolvable:$true] %s41
      %47 = dma.hbm_to_vmem [thread:$0]  %s40, 2304, %s42, [#allocation6], 256, 256, 16
    $region13: #{tpu_custom_call.1} parent=1 // pred_fallthru
      _
    // Predicated region
    $region14: #{tpu_custom_call.1} parent=1 // pred_check
      _
    $region15: #{tpu_custom_call.1} parent=1 // pred_check_branch
      %49 = sbr.rel (0) target = $region17
    $region16: #{tpu_custom_call.1} parent=1 // pred_region
      %51 = dma.done [#allocation3], 32
    $region17: #{tpu_custom_call.1} parent=1 // pred_fallthru
      _
    // Predicated region
    $region18: #{tpu_custom_call.1} parent=1 // pred_check
      _
    $region19: #{tpu_custom_call.1} parent=1 // pred_check_branch
      %53 = sbr.rel (0) target = $region21
    $region20: #{tpu_custom_call.1} parent=1 // pred_region
      %55 = dma.done [#allocation6], 256
    $region21: #{tpu_custom_call.1} parent=1 // pred_fallthru
      _
    // Predicated region
    $region22: #{tpu_custom_call.1} parent=1 // pred_check
      _
    $region23: #{tpu_custom_call.1} parent=1 // pred_check_branch
      %57 = sbr.rel (0) target = $region25
    $region24: #{tpu_custom_call.1} parent=1 // pred_region
      %59 = dma.done [#allocation6], 2304
    $region25: #{tpu_custom_call.1} parent=1 // pred_fallthru
      _
    %v60 = vld [vmem:[#allocation2] sm:$0x3]
    %v61 = vcvt.s32.f32 %v60
    %v62 = vld [vmem:[#allocation5] sm:$0xff]
    %v63 = vld [vmem:[#allocation5 + $0x8] sm:$0xff]
    %vm64 = vcmask 130048
    %v66 = vsel %vm64, %v61, 0
    %68 = vmatpush.msra.mxu0 0.0
    %69 = vmatpush.msra.mxu0 0.0
    %70 = vmatpush.msra.mxu0 0.0
    %71 = vmatpush.msra.mxu0 0.0
    %72 = vmatpush.msra.mxu0 0.0
    %73 = vmatpush.msra.mxu0 0.0
    %74 = vmatpush.msra.mxu0 0.0
    %75 = vmatpush.msra.mxu0 0.0
    %76 = vmatpush.msra.mxu0 0.0
    %77 = vmatpush.msra.mxu0 0.0
    %78 = vmatpush.msra.mxu0 0.0
    %79 = vmatpush.msra.mxu0 0.0
    %80 = vmatpush.msra.mxu0 0.0
    %81 = vmatpush.msra.mxu0 0.0
    %82 = vmatpush.msra.mxu0 %v63
    %83 = vmatpush.msra.mxu0 %v62
    %84 = vmatmul.f32.gmra.mxu0 %v66
    %v85 = vpop.f32.mrf.mxu0
    %v86 = vadd.f32 0.0, %v85
    %87 = vdwg.mxu0
    %v88 = vlaneseq
    %v89 = vand.u32 %v88, 127
    %v90 = vcvt.s32.f32 %v89
    %vm91 = vcmp.eq.f32.partialorder %v86, %v90
    %v92 = vsel %vm91, 1, 0
    %v93 = vcvt.s32.f32 %v92
    %v94 = vld [vmem:[#allocation7] sm:$0xff]
    %v95 = vld [vmem:[#allocation7 + $0x8] sm:$0xff]
    %v96 = vld [vmem:[#allocation7 + $0x10] sm:$0xff]
    %v97 = vld [vmem:[#allocation7 + $0x18] sm:$0xff]
    %v98 = vld [vmem:[#allocation7 + $0x20] sm:$0xff]
    %v99 = vld [vmem:[#allocation7 + $0x28] sm:$0xff]
    %v100 = vld [vmem:[#allocation7 + $0x30] sm:$0xff]
    %v101 = vld [vmem:[#allocation7 + $0x38] sm:$0xff]
    %v102 = vld [vmem:[#allocation7 + $0x40] sm:$0xff]
    %v103 = vld [vmem:[#allocation7 + $0x48] sm:$0xff]
    %v104 = vld [vmem:[#allocation7 + $0x50] sm:$0xff]
    %v105 = vld [vmem:[#allocation7 + $0x58] sm:$0xff]
    %v106 = vld [vmem:[#allocation7 + $0x60] sm:$0xff]
    %v107 = vld [vmem:[#allocation7 + $0x68] sm:$0xff]
    %v108 = vld [vmem:[#allocation7 + $0x70] sm:$0xff]
    %v109 = vld [vmem:[#allocation7 + $0x78] sm:$0xff]
    %v110 = vld [vmem:[#allocation7 + $0x80] sm:$0xff]
    %v111 = vld [vmem:[#allocation7 + $0x88] sm:$0xff]
    %vm112 = vcmask 588800
    %v114 = vsel %vm112, %v93, 0
    %116 = vmatpush.msra.mxu0 0.0
    %117 = vmatpush.msra.mxu0 0.0
    %118 = vmatpush.msra.mxu0 0.0
    %119 = vmatpush.msra.mxu0 0.0
    %120 = vmatpush.msra.mxu0 0.0
    %121 = vmatpush.msra.mxu0 0.0
    %122 = vmatpush.msra.mxu0 0.0
    %123 = vmatpush.msra.mxu0 %v110
    %124 = vmatpush.msra.mxu0 %v108
    %125 = vmatpush.msra.mxu0 %v106
    %126 = vmatpush.msra.mxu0 %v104
    %127 = vmatpush.msra.mxu0 %v102
    %128 = vmatpush.msra.mxu0 %v100
    %129 = vmatpush.msra.mxu0 %v98
    %130 = vmatpush.msra.mxu0 %v96
    %131 = vmatpush.msra.mxu0 %v94
    %132 = vmatmul.f32.gmra.mxu0 %v114
    %v133 = vpop.f32.mrf.mxu0
    %v134 = vadd.f32 0.0, %v133
    %135 = vdwg.mxu0
    %136 = vmatpush.msra.mxu0 0.0
    %137 = vmatpush.msra.mxu0 0.0
    %138 = vmatpush.msra.mxu0 0.0
    %139 = vmatpush.msra.mxu0 0.0
    %140 = vmatpush.msra.mxu0 0.0
    %141 = vmatpush.msra.mxu0 0.0
    %142 = vmatpush.msra.mxu0 0.0
    %143 = vmatpush.msra.mxu0 %v111
    %144 = vmatpush.msra.mxu0 %v109
    %145 = vmatpush.msra.mxu0 %v107
    %146 = vmatpush.msra.mxu0 %v105
    %147 = vmatpush.msra.mxu0 %v103
    %148 = vmatpush.msra.mxu0 %v101
    %149 = vmatpush.msra.mxu0 %v99
    %150 = vmatpush.msra.mxu0 %v97
    %151 = vmatpush.msra.mxu0 %v95
    %152 = vmatmul.f32.gmra.mxu0 %v114
    %v153 = vpop.f32.mrf.mxu0
    %v154 = vadd.f32 0.0, %v153
    %155 = vdwg.mxu0
    %v158 = vrot.slane %v154, 6
    %vm159 = vcmask 1041408
    %v160 = vsel %vm159, %v134, %v158
    %162 = vst [vmem:[#allocation8] sm:$0xf] %v160
    // Predicated region
    $region26: #{tpu_custom_call.1} parent=1 // pred_check
      _
    $region27: #{tpu_custom_call.1} parent=1 // pred_check_branch
      %164 = sbr.rel (0) target = $region29
    $region28: #{tpu_custom_call.1} parent=1 // pred_region
      %166 = vsyncadd [#allocation4], 0
      %s168 = sshll.u32 [#allocation8], 4
      %s169 = int_to_ptr.vmem [resolvable:$true] %s168
      %s170 = sshll.u32 %s3, 4
      %s171 = int_to_ptr.hbm [resolvable:$true] %s170
      %173 = dma.vmem_to_hbm [thread:$0]  %s169, 64, %s171, [#allocation4]
    $region29: #{tpu_custom_call.1} parent=1 // pred_fallthru
      _
    // Predicated region
    $region30: #{tpu_custom_call.1} parent=1 // pred_check
      _
    $region31: #{tpu_custom_call.1} parent=1 // pred_check_branch
      %175 = sbr.rel (0) target = $region33
    $region32: #{tpu_custom_call.1} parent=1 // pred_region
      %177 = dma.done [#allocation4], 64
    $region33: #{tpu_custom_call.1} parent=1 // pred_fallthru
      _
    %178 = vsyncpa [#allocation3], 1
    %179 = vsyncpa [#allocation6], 1
    %180 = vsyncpa [#allocation4], 1

</llo_original>
